<compile_context>
chip_gen: v7x
topology: tpu7x:2x2x1
jax: 0.10.0
libtpu: 0.0.40
codegen_flags: <defaults>
</compile_context>

<pallas_src>
import jax
import jax.numpy as jnp
import numpy as np
from jax import lax
from jax.experimental import pallas as pl
from jax.experimental.pallas import tpu as pltpu

# ----------------------------- module config (small, deterministic) -----------------------------
TF_DIM = 22
MSA_DIM = 49
C_Z = 32
C_M = 32
MAX_REL_IDX = 8
MAX_REL_CHAIN = 2
USE_CHAIN_RELATIVE = True
NB_POS = 2 * MAX_REL_IDX + 2        # 18  (rel position one-hot, incl. "different chain" bin)
NB_CHAIN = 2 * MAX_REL_CHAIN + 2    # 6   (rel chain one-hot, incl. "different entity" bin)
NUM_BINS = NB_POS + 1 + NB_CHAIN    # 25

N_RES = 32
N_SEQ = 4

MIB = 1024 * 1024


# ------------------------------------ tiling / budget helpers -----------------------------------
def _round_up(x, m):
    return (x + m - 1) // m * m


def _pick_tile(dim_pad, row_bytes, gran, target_bytes, min_steps=1):
    """Largest tile (multiple of `gran`) whose block is ~target_bytes, keeping >=min_steps steps."""
    t = (target_bytes // max(row_bytes, 1)) // gran * gran
    t = max(gran, min(dim_pad, t))
    if min_steps > 1 and dim_pad // t < min_steps and dim_pad >= min_steps * gran:
        t = max(gran, (dim_pad // min_steps) // gran * gran)
    return int(t)


def _vmem_limit(est_bytes):
    # Clamp to [32 MiB, 64 MiB]: 32 MiB is the v6e/v7x default scoped limit (safe on v5e's
    # 128 MiB physical); never ask for more than v7x's 64 MiB physical per-TC VMEM.
    return int(min(max(2 * est_bytes, 32 * MIB), 64 * MIB))


# ----------------------------------------- kernels ----------------------------------------------
def _proj_kernel(tf_ref, w_ref, b_ref, out_ref):
    """One fused loop-invariant projection: tf @ [w_zi | w_zj | w_tfm] + folded biases."""
    out_ref[...] = (jnp.dot(tf_ref[...], w_ref[...],
                            preferred_element_type=jnp.float32) + b_ref[...])


def _pair_kernel(idr_ref, idc_ref, tfi_ref, tfjb_ref, w_pos_ref, w_ec_ref, out_ref):
    ti = out_ref.shape[0]
    n, cz = tfjb_ref.shape
    row0 = pl.multiple_of(pl.program_id(0) * ti, ti)

    ids_r = idr_ref[pl.ds(row0, ti), :]                               # (ti, 4) int32, resident slice
    ids_c = idc_ref[...]                                              # (4, n)  int32, resident

    # ---------------- chain-relative relpos features ----------------
    off = ids_r[:, 0:1] - ids_c[0:1, :]                               # residue offset (ti, n)
    asym_same = ids_r[:, 1:2] == ids_c[1:2, :]
    off = jnp.clip(off + MAX_REL_IDX, 0, 2 * MAX_REL_IDX)
    off = jnp.where(asym_same, off, 2 * MAX_REL_IDX + 1)

    ent_same = ids_r[:, 2:3] == ids_c[2:3, :]
    rel_ch = jnp.clip(ids_r[:, 3:4] - ids_c[3:4, :] + MAX_REL_CHAIN, 0, 2 * MAX_REL_CHAIN)
    rel_ch = jnp.where(ent_same, rel_ch, 2 * MAX_REL_CHAIN + 1)

    # PyTorch does argmin(|offset - bins|); for integer-valued indices this is an exact one-hot.
    # TODO(synk): non-integer residue_index would need a true nearest-bin argmin here.
    # Two cheap pieces (instead of a 25-bin nested-select build):
    #   piece A: rel-position one-hot (NB_POS wide)
    #   piece B: [entity-same flag | rel-chain one-hot] (1 + NB_CHAIN wide)
    # merged on the MXU accumulator via two small f32 matmuls against w_relpos slices
    # (keeps w_relpos in f32 for parity; K=18/7, N=32 -> negligible MXU cost).
    pos_bins = lax.broadcasted_iota(jnp.int32, (1, 1, NB_POS), 2)
    pos_oh = (off[:, :, None] == pos_bins).astype(jnp.float32)        # (ti, n, NB_POS)
    ec_bins = lax.broadcasted_iota(jnp.int32, (1, 1, NB_CHAIN + 1), 2)
    ec_oh = jnp.where(ec_bins == 0, ent_same[:, :, None],
                      rel_ch[:, :, None] == (ec_bins - 1)).astype(jnp.float32)  # (ti, n, 7)

    relp = (jnp.dot(pos_oh.reshape(ti * n, NB_POS), w_pos_ref[...],
                    preferred_element_type=jnp.float32)
            + jnp.dot(ec_oh.reshape(ti * n, NB_CHAIN + 1), w_ec_ref[...],
                      preferred_element_type=jnp.float32)).reshape(ti, n, cz)

    # Broadcast adds: tf_emb_i over columns, (tf_emb_j + b_relpos) over rows (biases pre-folded).
    pair = relp + tfi_ref[pl.ds(row0, ti), :][:, None, :] + tfjb_ref[...][None, :, :]

    # Single reshape at the store; lane-dense (n*cz multiple of 128) -> unmasked vst, bf16 halves
    # the HBM write traffic.
    out_ref[...] = pair.reshape(ti, n * cz).astype(out_ref.dtype)


def _msa_kernel(msa_ref, tfm_ref, w_msa_ref, out_ref):
    ts, n, dm = msa_ref.shape
    cm = tfm_ref.shape[-1]
    # bf16 operands with f32 accumulation; one matmul over ts*n rows feeds the MXU M-dim.
    x = msa_ref[...].astype(jnp.bfloat16).reshape(ts * n, dm)
    m = jnp.dot(x, w_msa_ref[...], preferred_element_type=jnp.float32).reshape(ts, n, cm)
    m = m + tfm_ref[...][None, :, :]                 # tf_m (+ b_tfm + b_msa) resident, no recompute
    out_ref[...] = m.reshape(ts, n * cm).astype(out_ref.dtype)        # lane-dense store


# ---------------------------------------- wrapper ------------------------------------------------
def input_embedder_multimer(target_feat, residue_index, msa_feat,
                            asym_id, entity_id, sym_id, params,
                            out_dtype=jnp.bfloat16):
    n, tf_dim = target_feat.shape
    s, _, msa_dim = msa_feat.shape
    c_z = params["w_zi"].shape[1]
    c_m = params["w_msa"].shape[1]

    out_isz = np.dtype(out_dtype).itemsize
    sub_g = max(8, 32 // out_isz)          # sublane granularity of the output tiles (16 for bf16)

    # ---- padding + tile selection (ragged N_res / N_seq handled by zero pad + output slice) ----
    n_pad = _round_up(n, sub_g)
    tile_i = _pick_tile(n_pad, n_pad * c_z * out_isz, sub_g,
                        target_bytes=4 * MIB, min_steps=2)   # >=2 steps -> both v7x TCs get work
    n_pad = _round_up(n_pad, tile_i)

    lane_dm = _round_up(msa_dim, 128)       # msa last dim lane-pads 49 -> 128 in VMEM (budget it)
    s_pad = _round_up(s, sub_g)
    tile_s = _pick_tile(s_pad, n_pad * lane_dm * 4, sub_g, target_bytes=8 * MIB)
    s_pad = _round_up(s_pad, tile_s)

    tf_p = jnp.pad(target_feat, ((0, n_pad - n), (0, 0)))
    msa_p = jnp.pad(msa_feat, ((0, s_pad - s), (0, n_pad - n), (0, 0)))
    ids_col = jnp.pad(
        jnp.stack([residue_index, asym_id, entity_id, sym_id], axis=0).astype(jnp.int32),
        ((0, 0), (0, n_pad - n)))                            # (4, n_pad), resident columns
    ids_row = ids_col.T                                      # (n_pad, 4), resident, row-sliced in-kernel

    # ---- Kernel 0: one fused loop-invariant projection ----
    # tf @ [w_zi | w_zj | w_tfm], with b_relpos folded into the j slice and b_msa into the m slice.
    w_cat = jnp.concatenate([params["w_zi"], params["w_zj"], params["w_tfm"]], axis=1)
    b_cat = jnp.concatenate([params["b_zi"],
                             params["b_zj"] + params["b_relpos"],
                             params["b_tfm"] + params["b_msa"]], axis=1)
    c_tot = 2 * c_z + c_m

    proj = pl.pallas_call(
        _proj_kernel,
        out_shape=jax.ShapeDtypeStruct((n_pad, c_tot), jnp.float32),
        grid=(1,),
        in_specs=[pl.BlockSpec((n_pad, tf_dim), lambda i: (0, 0)),
                  pl.BlockSpec((tf_dim, c_tot), lambda i: (0, 0)),
                  pl.BlockSpec((1, c_tot), lambda i: (0, 0))],
        out_specs=pl.BlockSpec((n_pad, c_tot), lambda i: (0, 0)),
    )(tf_p, w_cat, b_cat)
    tf_i = proj[:, :c_z]                    # tf @ w_zi + b_zi
    tf_jb = proj[:, c_z:2 * c_z]            # tf @ w_zj + b_zj + b_relpos
    tf_m = proj[:, 2 * c_z:]                # tf @ w_tfm + b_tfm + b_msa

    # ---- Kernel 1: pair embedding (row-tiled, parallel, bf16 lane-dense output) ----
    pair_est = (2 * tile_i * n_pad * c_z * out_isz              # output double buffer
                + 2 * (n_pad * 128 + 8 * n_pad) * 4             # ids_row / ids_col (lane/sublane pad)
                + 2 * 2 * n_pad * c_z * 4                       # tf_i, tf_jb residents
                + 2 * 2 * 8 * 128 * 4)                          # w_relpos slices (padded, tiny)
    # TODO(synk): on v7x consider pltpu.CORE_PARALLEL on this axis (or an explicit core_map split)
    # and pipeline_mode=pl.Buffered(3) on out_specs if the output writeback is exposed.
    pair2d = pl.pallas_call(
        _pair_kernel,
        out_shape=jax.ShapeDtypeStruct((n_pad, n_pad * c_z), out_dtype),   # lane-dense slab
        grid=(n_pad // tile_i,),
        in_specs=[
            pl.BlockSpec((n_pad, 4), lambda i: (0, 0)),          # ids rows (resident)
            pl.BlockSpec((4, n_pad), lambda i: (0, 0)),          # ids cols (resident)
            pl.BlockSpec((n_pad, c_z), lambda i: (0, 0)),        # tf_emb_i (resident)
            pl.BlockSpec((n_pad, c_z), lambda i: (0, 0)),        # tf_emb_j + b_relpos (resident)
            pl.BlockSpec((NB_POS, c_z), lambda i: (0, 0)),       # w_relpos[:18]   (f32)
            pl.BlockSpec((NB_CHAIN + 1, c_z), lambda i: (0, 0)), # w_relpos[18:]   (f32)
        ],
        out_specs=pl.BlockSpec((tile_i, n_pad * c_z), lambda i: (i, 0)),
        compiler_params=pltpu.CompilerParams(
            dimension_semantics=("parallel",),
            vmem_limit_bytes=_vmem_limit(pair_est)),
    )(ids_row, ids_col, tf_i, tf_jb,
      params["w_relpos"][:NB_POS], params["w_relpos"][NB_POS:])
    pair_emb = pair2d.reshape(n_pad, n_pad, c_z)[:n, :n]        # cheap metadata reshape + slice

    # ---- Kernel 2: MSA embedding (sequence-tiled, bf16 matmul operands) ----
    msa_est = (2 * tile_s * n_pad * lane_dm * 4                 # input double buffer (lane-padded)
               + 2 * tile_s * n_pad * c_m * out_isz             # output double buffer
               + 2 * n_pad * c_m * 4 + 2 * lane_dm * c_m * 2)
    # TODO(synk): at production N_res, presenting msa_feat as a lane-dense (S, N*msa_dim) slab
    # would avoid the 49->128 lane padding of the input tile if the in-kernel reshape is cheap.
    msa2d = pl.pallas_call(
        _msa_kernel,
        out_shape=jax.ShapeDtypeStruct((s_pad, n_pad * c_m), out_dtype),   # lane-dense slab
        grid=(s_pad // tile_s,),
        in_specs=[
            pl.BlockSpec((tile_s, n_pad, msa_dim), lambda i: (i, 0, 0)),
            pl.BlockSpec((n_pad, c_m), lambda i: (0, 0)),        # tf_m (+ biases), resident
            pl.BlockSpec((msa_dim, c_m), lambda i: (0, 0)),      # w_msa (bf16)
        ],
        out_specs=pl.BlockSpec((tile_s, n_pad * c_m), lambda i: (i, 0)),
        compiler_params=pltpu.CompilerParams(
            dimension_semantics=("parallel",),
            vmem_limit_bytes=_vmem_limit(msa_est)),
    )(msa_p, tf_m, params["w_msa"].astype(jnp.bfloat16))
    msa_emb = msa2d.reshape(s_pad, n_pad, c_m)[:s, :n]

    return msa_emb, pair_emb


# --------------------------------- pure-JAX reference (for check) --------------------------------
def reference(target_feat, residue_index, msa_feat, asym_id, entity_id, sym_id, params):
    lin = lambda x, w, b: jnp.dot(x, w, precision=lax.Precision.HIGHEST) + b
    tf_emb_i = lin(target_feat, params["w_zi"], params["b_zi"])
    tf_emb_j = lin(target_feat, params["w_zj"], params["b_zj"])

    asym_same = asym_id[:, None] == asym_id[None, :]
    offset = residue_index[:, None] - residue_index[None, :]
    offset = jnp.clip(offset + MAX_REL_IDX, 0, 2 * MAX_REL_IDX)
    offset = jnp.where(asym_same, offset, 2 * MAX_REL_IDX + 1)
    rel_pos = jax.nn.one_hot(offset, NB_POS, dtype=jnp.float32)
    ent_same = entity_id[:, None] == entity_id[None, :]
    rel_sym = sym_id[:, None] - sym_id[None, :]
    rel_chain = jnp.clip(rel_sym + MAX_REL_CHAIN, 0, 2 * MAX_REL_CHAIN)
    rel_chain = jnp.where(ent_same, rel_chain, 2 * MAX_REL_CHAIN + 1)
    rel_ch = jax.nn.one_hot(rel_chain, NB_CHAIN, dtype=jnp.float32)
    rel_feat = jnp.concatenate(
        [rel_pos, ent_same.astype(jnp.float32)[..., None], rel_ch], axis=-1)
    pair = lin(rel_feat, params["w_relpos"], params["b_relpos"])
    pair = pair + tf_emb_i[:, None, :] + tf_emb_j[None, :, :]

    msa_emb = lin(msa_feat, params["w_msa"], params["b_msa"])
    msa_emb = msa_emb + lin(target_feat, params["w_tfm"], params["b_tfm"])[None]
    return msa_emb, pair


# ------------------------------------------- main ------------------------------------------------
if __name__ == "__main__":
    key = jax.random.PRNGKey(0)
    ks = jax.random.split(key, 12)

    # Deterministic parameter init (Linear weights stored as [in, out] = W.T, biases as [1, out]).
    params = {
        "w_zi": 0.1 * jax.random.normal(ks[0], (TF_DIM, C_Z), jnp.float32),
        "b_zi": 0.1 * jax.random.normal(ks[1], (1, C_Z), jnp.float32),
        "w_zj": 0.1 * jax.random.normal(ks[2], (TF_DIM, C_Z), jnp.float32),
        "b_zj": 0.1 * jax.random.normal(ks[3], (1, C_Z), jnp.float32),
        "w_tfm": 0.1 * jax.random.normal(ks[4], (TF_DIM, C_M), jnp.float32),
        "b_tfm": 0.1 * jax.random.normal(ks[5], (1, C_M), jnp.float32),
        "w_msa": 0.1 * jax.random.normal(ks[6], (MSA_DIM, C_M), jnp.float32),
        "b_msa": 0.1 * jax.random.normal(ks[7], (1, C_M), jnp.float32),
        "w_relpos": 0.1 * jax.random.normal(ks[8], (NUM_BINS, C_Z), jnp.float32),
        "b_relpos": 0.1 * jax.random.normal(ks[9], (1, C_Z), jnp.float32),
    }

    # Inputs: two chains of 16 residues, same entity, different sym/asym ids.
    target_feat = jax.random.normal(ks[10], (N_RES, TF_DIM), jnp.float32)
    msa_feat = jax.random.normal(ks[11], (N_SEQ, N_RES, MSA_DIM), jnp.float32)
    residue_index = jnp.concatenate([jnp.arange(N_RES // 2, dtype=jnp.int32)] * 2)
    asym_id = jnp.concatenate(
        [jnp.zeros(N_RES // 2, jnp.int32), jnp.ones(N_RES // 2, jnp.int32)])
    entity_id = jnp.zeros(N_RES, jnp.int32)
    sym_id = jnp.concatenate(
        [jnp.zeros(N_RES // 2, jnp.int32), jnp.ones(N_RES // 2, jnp.int32)])

    msa_emb, pair_emb = input_embedder_multimer(
        target_feat, residue_index, msa_feat, asym_id, entity_id, sym_id, params)
    jax.block_until_ready((msa_emb, pair_emb))

    msa_ref, pair_ref = reference(
        target_feat, residue_index, msa_feat, asym_id, entity_id, sym_id, params)
    np.testing.assert_allclose(np.asarray(msa_emb.astype(jnp.float32)), np.asarray(msa_ref),
                               rtol=2e-2, atol=2e-2)
    np.testing.assert_allclose(np.asarray(pair_emb.astype(jnp.float32)), np.asarray(pair_ref),
                               rtol=2e-2, atol=2e-2)
    print("KERNEL_OK")
</pallas_src>

<mosaic_0001>
module attributes {stable_mosaic.version = 11 : i64} {
  func.func @_proj_kernel(%arg0: i32, %arg1: memref<32x22xf32, #tpu.memory_space<vmem>>, %arg2: memref<22x96xf32, #tpu.memory_space<vmem>>, %arg3: memref<1x96xf32, #tpu.memory_space<vmem>>, %arg4: memref<32x96xf32, #tpu.memory_space<vmem>>) attributes {dimension_semantics = [#tpu.dimension_semantics<arbitrary>], iteration_bounds = array<i64: 1>, scalar_prefetch = 0 : i64, scratch_operands = 0 : i64, tpu.core_type = #tpu.core_type<tc>, window_params = [{pipeline_mode = #tpu.pipeline_mode<synchronous>, transform_indices = @transform_0, window_bounds = array<i64: 32, 22>}, {pipeline_mode = #tpu.pipeline_mode<synchronous>, transform_indices = @transform_1, window_bounds = array<i64: 22, 96>}, {pipeline_mode = #tpu.pipeline_mode<synchronous>, transform_indices = @transform_2, window_bounds = array<i64: 1, 96>}, {pipeline_mode = #tpu.pipeline_mode<synchronous>, transform_indices = @transform_3, window_bounds = array<i64: 32, 96>}]} {
    %c0 = arith.constant 0 : index
    %c0_0 = arith.constant 0 : index
    %0 = vector.load %arg1[%c0, %c0_0] : memref<32x22xf32, #tpu.memory_space<vmem>>, vector<32x22xf32>
    %c0_1 = arith.constant 0 : index
    %c0_2 = arith.constant 0 : index
    %1 = vector.load %arg2[%c0_1, %c0_2] : memref<22x96xf32, #tpu.memory_space<vmem>>, vector<22x96xf32>
    %cst = arith.constant dense<0.000000e+00> : vector<32x96xf32>
    %2 = tpu.matmul %0, %1, %cst {dimension_numbers = #tpu.dot_dimension_numbers<[1], [0], [0], [1], [0, 0, 1, 1], [], []>} : vector<32x22xf32>, vector<22x96xf32>, vector<32x96xf32> -> vector<32x96xf32>
    %c0_3 = arith.constant 0 : index
    %c0_4 = arith.constant 0 : index
    %3 = vector.load %arg3[%c0_3, %c0_4] : memref<1x96xf32, #tpu.memory_space<vmem>>, vector<1x96xf32>
    %4 = vector.broadcast %3 : vector<1x96xf32> to vector<32x96xf32>
    %5 = arith.addf %2, %4 : vector<32x96xf32>
    %c0_5 = arith.constant 0 : index
    %c0_6 = arith.constant 0 : index
    %6 = vector.load %arg4[%c0_5, %c0_6] : memref<32x96xf32, #tpu.memory_space<vmem>>, vector<32x96xf32>
    tpu.vector_store %arg4[%c0_5, %c0_6], %5 {strides = array<i32>} : memref<32x96xf32, #tpu.memory_space<vmem>>, vector<32x96xf32>,
    return
  }
  func.func @transform_0(%arg0: i32) -> (i32, i32) {
    %c0_i32 = arith.constant 0 : i32
    %c0_i32_0 = arith.constant 0 : i32
    %c0_i32_1 = arith.constant 0 : i32
    return %c0_i32, %c0_i32_0 : i32, i32
  }
  func.func @transform_1(%arg0: i32) -> (i32, i32) {
    %c0_i32 = arith.constant 0 : i32
    %c0_i32_0 = arith.constant 0 : i32
    %c0_i32_1 = arith.constant 0 : i32
    return %c0_i32, %c0_i32_0 : i32, i32
  }
  func.func @transform_2(%arg0: i32) -> (i32, i32) {
    %c0_i32 = arith.constant 0 : i32
    %c0_i32_0 = arith.constant 0 : i32
    %c0_i32_1 = arith.constant 0 : i32
    return %c0_i32, %c0_i32_0 : i32, i32
  }
  func.func @transform_3(%arg0: i32) -> (i32, i32) {
    %c0_i32 = arith.constant 0 : i32
    %c0_i32_0 = arith.constant 0 : i32
    %c0_i32_1 = arith.constant 0 : i32
    return %c0_i32, %c0_i32_0 : i32, i32
  }
}

</mosaic_0001>

<llo_original>
// kernel: tpu_custom_call.1
$region0: #{tpu_custom_call.1}
  #allocation0 [shape = 'u32[]', space=smem, size = 0x4, offset = 0x4, fixed_abs, tag = 'smem constant byte address 0x4 - core index']
  #allocation1 [shape = 'u32[144,128]{1,0:T(1,128)}', space=vmem, size = 0x12000, scoped, tag = 'internal scratch']
  %s0 = inlined_call_operand.vmem [shape: f32[32,22], index: 0, kind: input, shape index: {}]
  %s1 = inlined_call_operand.vmem [shape: f32[22,96], index: 1, kind: input, shape index: {}]
  %s2 = inlined_call_operand.vmem [shape: f32[1,96], index: 2, kind: input, shape index: {}]
  %s3 = inlined_call_operand.hbm [shape: f32[32,96], index: 3, kind: output, shape index: {}]
  %s4 = sld [smem:[#allocation0]]
  $region22: #{tpu_custom_call.1} parent=0
    _
  %s6 = ssub.s32 1, %s4
  %s7 = scalar_select 0, %s6, %s4
  $region1: #{tpu_custom_call.1} parent=0
    #allocation2 [shape = 'u8[16384]{0}', space=vmem, size = 0x4000, scoped, tag = 'output window, operand 0, single buffered']
    #allocation3 [shape = 's32[1]{0}', space=sflag, size = 0x4, scoped, tag = 'scoped memory for tpu_custom_call.1']
    %8 = vsyncpa [#allocation3], 0
    // Predicated region
    $region2: #{tpu_custom_call.1} parent=1 // pred_check
      _
    $region3: #{tpu_custom_call.1} parent=1 // pred_check_branch
      %10 = sbr.rel (0) target = $region5
    $region4: #{tpu_custom_call.1} parent=1 // pred_region
      _
    $region5: #{tpu_custom_call.1} parent=1 // pred_fallthru
      _
    // Predicated region
    $region6: #{tpu_custom_call.1} parent=1 // pred_check
      _
    $region7: #{tpu_custom_call.1} parent=1 // pred_check_branch
      %12 = sbr.rel (0) target = $region9
    $region8: #{tpu_custom_call.1} parent=1 // pred_region
      _
    $region9: #{tpu_custom_call.1} parent=1 // pred_fallthru
      _
    // Predicated region
    $region10: #{tpu_custom_call.1} parent=1 // pred_check
      _
    $region11: #{tpu_custom_call.1} parent=1 // pred_check_branch
      %14 = sbr.rel (0) target = $region13
    $region12: #{tpu_custom_call.1} parent=1 // pred_region
      _
    $region13: #{tpu_custom_call.1} parent=1 // pred_fallthru
      _
    %v15 = vld [vmem:[%s0] sm:$0xff]
    %v16 = vld [vmem:[%s0 + $0x8] sm:$0xff]
    %v17 = vld [vmem:[%s0 + $0x10] sm:$0xff]
    %v18 = vld [vmem:[%s0 + $0x18] sm:$0xff]
    %v19 = vld [vmem:[%s1] sm:$0xff]
    %v20 = vld [vmem:[%s1 + $0x8] sm:$0xff]
    %v21 = vld [vmem:[%s1 + $0x10] sm:$0x3f]
    %v22 = vld [vmem:[%s2] sm:$0x1]
    %v24 = vlaneseq
    %v25 = vshrl.u32 %v24, 7
    %v26 = vsub.s32 0, %v25
    %v27 = vrot.slane %v22, %v26
    %vm29 = vcmask 179200
    %v31 = vsel %vm29, %v15, 0
    %v34 = vsel %vm29, %v16, 0
    %v37 = vsel %vm29, %v17, 0
    %v40 = vsel %vm29, %v18, 0
    %vm42 = vcmask 1045504
    %v44 = vsel %vm42, %v21, 0
    %46 = vmatprep.subr.mxu0 0.0
    %47 = vmatpush1.msra.mxu0 %v19
    %48 = vmatprep.subr.mxu0 0.0
    %49 = vmatpush1.msra.mxu0 %v20
    %50 = vmatprep.subr.mxu0 0.0
    %51 = vmatpush1.msra.mxu0 %v44
    %52 = vmatprep.subr.mxu0 0.0
    %53 = vmatpush1.msra.mxu0 0.0
    %54 = vmatprep.subr.mxu0 0.0
    %55 = vmatpush1.msra.mxu0 0.0
    %56 = vmatprep.subr.mxu0 0.0
    %57 = vmatpush1.msra.mxu0 0.0
    %58 = vmatprep.subr.mxu0 0.0
    %59 = vmatpush1.msra.mxu0 0.0
    %60 = vmatprep.subr.mxu0 0.0
    %61 = vmatpush1.msra.mxu0 0.0
    %62 = vmatprep.subr.mxu0 0.0
    %63 = vmatpush1.msra.mxu0 0.0
    %64 = vmatprep.subr.mxu0 0.0
    %65 = vmatpush1.msra.mxu0 0.0
    %66 = vmatprep.subr.mxu0 0.0
    %67 = vmatpush1.msra.mxu0 0.0
    %68 = vmatprep.subr.mxu0 0.0
    %69 = vmatpush1.msra.mxu0 0.0
    %70 = vmatprep.subr.mxu0 0.0
    %71 = vmatpush1.msra.mxu0 0.0
    %72 = vmatprep.subr.mxu0 0.0
    %73 = vmatpush1.msra.mxu0 0.0
    %74 = vmatprep.subr.mxu0 0.0
    %75 = vmatpush1.msra.mxu0 0.0
    %76 = vmatprep.subr.mxu0 0.0
    %77 = vmatpush1.msra.mxu0 0.0
    %78 = vmatprep.subr.mxu0 0.0
    %79 = vmatpush1.msra.mxu0 0.0
    %80 = vmatprep.subr.mxu0 0.0
    %81 = vmatpush1.msra.mxu0 0.0
    %82 = vmatprep.subr.mxu0 0.0
    %83 = vmatpush1.msra.mxu0 0.0
    %84 = vmatprep.subr.mxu0 0.0
    %85 = vmatpush1.msra.mxu0 0.0
    %86 = vmatprep.subr.mxu0 0.0
    %87 = vmatpush1.msra.mxu0 0.0
    %88 = vmatprep.subr.mxu0 0.0
    %89 = vmatpush1.msra.mxu0 0.0
    %90 = vmatprep.subr.mxu0 0.0
    %91 = vmatpush1.msra.mxu0 0.0
    %92 = vmatprep.subr.mxu0 0.0
    %93 = vmatpush1.msra.mxu0 0.0
    %94 = vmatprep.subr.mxu0 0.0
    %95 = vmatpush1.msra.mxu0 0.0
    %96 = vmatprep.subr.mxu0 0.0
    %97 = vmatpush1.msra.mxu0 0.0
    %98 = vmatprep.subr.mxu0 0.0
    %99 = vmatpush1.msra.mxu0 0.0
    %100 = vmatprep.subr.mxu0 0.0
    %101 = vmatpush1.msra.mxu0 0.0
    %102 = vmatprep.subr.mxu0 0.0
    %103 = vmatpush1.msra.mxu0 0.0
    %104 = vmatprep.subr.mxu0 0.0
    %105 = vmatpush1.msra.mxu0 0.0
    %106 = vmatprep.subr.mxu0 0.0
    %107 = vmatpush1.msra.mxu0 0.0
    %108 = vmatprep.subr.mxu0 0.0
    %109 = vmatpush1.msra.mxu0 0.0
    %110 = vmatprep.mubr.f32.mxu0 0.0
    %111 = vmatmul.mubr.f32.gmra.mrb[0].mxu0 %v31
    %v112 = vpop.f32.mrb[0].mxu0
    %v113 = vadd.f32 %v27, %v112
    %v114 = vpop.f32.mrb[0].mxu0
    %115 = vmatprep.mubr.f32.mxu0 0.0
    %116 = vmatmul.mubr.f32.gmra.mrb[0].mxu0 %v34
    %v117 = vpop.f32.mrb[0].mxu0
    %v118 = vadd.f32 %v27, %v117
    %v119 = vpop.f32.mrb[0].mxu0
    %120 = vmatprep.mubr.f32.mxu0 0.0
    %121 = vmatmul.mubr.f32.gmra.mrb[0].mxu0 %v37
    %v122 = vpop.f32.mrb[0].mxu0
    %v123 = vadd.f32 %v27, %v122
    %v124 = vpop.f32.mrb[0].mxu0
    %125 = vmatprep.mubr.f32.mxu0 0.0
    %126 = vmatmul.mubr.f32.gmra.mrb[0].mxu0 %v40
    %v127 = vpop.f32.mrb[0].mxu0
    %v128 = vadd.f32 %v27, %v127
    %v129 = vpop.f32.mrb[0].mxu0
    %130 = vdwg.mxu0
    %vm131 = vcmask 785408
    %132 = vst.msk [vmem:[#allocation2] sm:$0xff] %vm131, %v113
    %133 = vst.msk [vmem:[#allocation2 + $0x8] sm:$0xff] %vm131, %v118
    %134 = vst.msk [vmem:[#allocation2 + $0x10] sm:$0xff] %vm131, %v123
    %135 = vst.msk [vmem:[#allocation2 + $0x18] sm:$0xff] %vm131, %v128
    // Predicated region
    $region14: #{tpu_custom_call.1} parent=1 // pred_check
      _
    $region15: #{tpu_custom_call.1} parent=1 // pred_check_branch
      %137 = sbr.rel (0) target = $region17
    $region16: #{tpu_custom_call.1} parent=1 // pred_region
      %s139 = ssub.s32 512, 512
      %140 = vsyncadd [#allocation3], %s139
      %s141 = sshll.u32 [#allocation2], 4
      %s142 = int_to_ptr.vmem [resolvable:$true] %s141
      %147 = dma.vmem_to_hbm [thread:$0]  %s142, 512, %s3, [#allocation3], 128, 128, 8
    $region17: #{tpu_custom_call.1} parent=1 // pred_fallthru
      _
    // Predicated region
    $region18: #{tpu_custom_call.1} parent=1 // pred_check
      _
    $region19: #{tpu_custom_call.1} parent=1 // pred_check_branch
      %149 = sbr.rel (0) target = $region21
    $region20: #{tpu_custom_call.1} parent=1 // pred_region
      %150 = dma.done [#allocation3], 512
    $region21: #{tpu_custom_call.1} parent=1 // pred_fallthru
      _
    %151 = vsyncpa [#allocation3], 1

</llo_original>
